<compile_context>
chip_gen: v5e
topology: v5e:2x2
jax: 0.10.0
libtpu: 0.0.40
codegen_flags: <defaults>
</compile_context>

<pallas_src>
import jax
import jax.numpy as jnp
from jax.experimental import pallas as pl
from jax.experimental.pallas import tpu as pltpu


def _attention_kernel(h_ref, w_ref, b_ref, r_ref, alpha_ref):
    # h_ref:     (Bt, T, D)   VMEM  slab of Bi-LSTM outputs (native dtype)
    # w_ref:     (1, D)       VMEM  attention projection weight (out_features=1)
    # b_ref:     (1, 1)       SMEM  scalar bias
    # r_ref:     (Bt, 1, D)   VMEM  sentence representations (squeezed outside)
    # alpha_ref: (Bt, T, 1)   VMEM  attention weights (squeezed outside)
    h = h_ref[...]                                   # keep native dtype (f32/bf16)
    w = w_ref[...].astype(h.dtype)                   # (1, D) -> broadcasts over (Bt, T)
    b = b_ref[0, 0]                                  # scalar via SMEM/sreg path

    # M = tanh(H)  -> EUP (bf16-native on v6e/v7x; f32 on v5e)
    m = jnp.tanh(h)                                  # (Bt, T, D)

    # logits[b,t] = sum_d M*w + b : VPU broadcast-mul + minor-axis reduce,
    # accumulated in f32. (MXU mapping of this reduce would need a lane<->sublane
    # relayout of the (Bt*T,1) result; kernel is HBM-bound so VPU/XLU is fine.)
    logits = jnp.sum((m * w).astype(jnp.float32), axis=-1, keepdims=True) + b   # (Bt, T, 1)

    # Numerically-stable softmax over the sequence axis (axis=1), exact divide.
    logits = logits - jnp.max(logits, axis=1, keepdims=True)
    e = jnp.exp(logits)                              # (Bt, T, 1) f32
    denom = jnp.sum(e, axis=1, keepdims=True)        # (Bt, 1, 1) f32
    alpha = e / denom                                # exact: tiny tensor, exactness matters
    alpha_ref[...] = alpha.astype(alpha_ref.dtype)

    # r = sum_t H * alpha : lane-broadcast multiply (no relayout) + sublane
    # accumulation over T in f32.
    weighted = h * alpha.astype(h.dtype)             # (Bt, T, D)
    r = jnp.sum(weighted, axis=1, keepdims=True, dtype=jnp.float32)   # (Bt, 1, D)
    r_ref[...] = r.astype(r_ref.dtype)


def attention_forward(H, w, b, *, block_b=None):
    """H: (B, T, D) f32/bf16; w: (1, D); b: (1, 1). Returns (r:(B,D), alpha:(B,T))."""
    B, T, D = H.shape
    assert w.shape == (1, D), f"w must be (1, {D}), got {w.shape}"
    b = jnp.asarray(b, jnp.float32).reshape(1, 1)

    if block_b is None:
        # Raw H bytes for one (padded) batch row.
        d_pad = max(128, pl.cdiv(D, 128) * 128)
        t_pad = max(8, pl.cdiv(T, 8) * 8)
        itemsize = jnp.dtype(H.dtype).itemsize
        slab_bytes = t_pad * d_pad * itemsize
        # In-kernel working set is ~3-4x the H slab (tanh temp, f32 product,
        # weighted product) plus 2x input double-buffering, so budget ~2 MiB of
        # raw H per slab; >=1-2 MiB tiles already sit near the HBM roofline.
        budget = 2 * 1024 * 1024
        block_b = max(1, min(B, budget // slab_bytes))
        # Keep the auto-pipeline busy: target >= 8 grid steps (>= 4 per core on
        # a 2-TC v7x) as long as each slab stays >= ~512 KiB.
        min_rows = max(1, (512 * 1024) // slab_bytes)
        if B >= 2 * min_rows:
            block_b = min(block_b, max(min_rows, pl.cdiv(B, 8)))
        # Sublane-align AFTER capping so edge tiles stay unmasked.
        if block_b >= 8:
            block_b -= block_b % 8
        block_b = max(1, min(block_b, B))
        # TODO(synk): for extreme T*D where even a single (1,T,D) slab exceeds the
        # budget, add a second "arbitrary" grid axis over T with an online-softmax
        # accumulator (running max / e-sum / weighted-r) in VMEM scratch.

    grid = (pl.cdiv(B, block_b),)

    r3, alpha3 = pl.pallas_call(
        _attention_kernel,
        out_shape=(
            jax.ShapeDtypeStruct((B, 1, D), H.dtype),
            jax.ShapeDtypeStruct((B, T, 1), H.dtype),
        ),
        grid_spec=pltpu.PrefetchScalarGridSpec(
            num_scalar_prefetch=0,
            grid=grid,
            in_specs=[
                pl.BlockSpec((block_b, T, D), lambda i: (i, 0, 0)),   # H slab
                pl.BlockSpec((1, D), lambda i: (0, 0)),               # weight (bcast)
                pl.BlockSpec(memory_space=pltpu.MemorySpace.SMEM),    # scalar bias
            ],
            out_specs=[
                pl.BlockSpec((block_b, 1, D), lambda i: (i, 0, 0)),   # r
                pl.BlockSpec((block_b, T, 1), lambda i: (i, 0, 0)),   # alpha
            ],
        ),
        compiler_params=pltpu.CompilerParams(
            dimension_semantics=("parallel",),
            vmem_limit_bytes=32 * 1024 * 1024,
        ),
    )(H, w, b)

    # Trailing/middle singleton squeezes are free in XLA (outside the kernel).
    return r3[:, 0, :], alpha3[:, :, 0]


def attention_reference(H, w, b):
    """Pure-JAX reference matching the PyTorch forward exactly."""
    Hf = H.astype(jnp.float32)
    M = jnp.tanh(Hf)                                             # (B, T, D)
    logits = jnp.einsum("btd,d->bt", M, w[0].astype(jnp.float32)) + b[0, 0]
    alpha = jax.nn.softmax(logits, axis=1)                       # softmax over dim=1
    r = jnp.sum(Hf * alpha[:, :, None], axis=1)                  # (B, D)
    return r.astype(H.dtype), alpha.astype(H.dtype)


if __name__ == "__main__":
    # Small shapes consistent with the module: batch=2, word_pad_len=8, rnn_size=32
    B, T, D = 2, 8, 32

    key = jax.random.PRNGKey(0)
    k_h, k_w, k_b = jax.random.split(key, 3)

    H = jax.random.normal(k_h, (B, T, D), dtype=jnp.float32)

    # Deterministic Linear(rnn_size, 1) init, PyTorch-style uniform(-1/sqrt(D), 1/sqrt(D))
    bound = 1.0 / (D ** 0.5)
    w = jax.random.uniform(k_w, (1, D), minval=-bound, maxval=bound, dtype=jnp.float32)
    b = jax.random.uniform(k_b, (1, 1), minval=-bound, maxval=bound, dtype=jnp.float32)

    r, alpha = attention_forward(H, w, b)
    r = jax.block_until_ready(r)
    alpha = jax.block_until_ready(alpha)

    r_ref, alpha_ref = attention_reference(H, w, b)

    assert r.shape == (B, D) and alpha.shape == (B, T)
    assert jnp.allclose(alpha, alpha_ref, atol=1e-5, rtol=1e-4)
    assert jnp.allclose(r, r_ref, atol=1e-5, rtol=1e-4)
    assert jnp.allclose(jnp.sum(alpha, axis=1), 1.0, atol=1e-5)

    print("KERNEL_OK")
</pallas_src>

<mosaic_0001>
module attributes {stable_mosaic.version = 11 : i64} {
  func.func @_attention_kernel(%arg0: i32, %arg1: memref<2x8x32xf32, #tpu.memory_space<vmem>>, %arg2: memref<1x32xf32, #tpu.memory_space<vmem>>, %arg3: memref<1x1xf32, #tpu.memory_space<smem>>, %arg4: memref<2x1x32xf32, #tpu.memory_space<vmem>>, %arg5: memref<2x8x1xf32, #tpu.memory_space<vmem>>) attributes {dimension_semantics = [#tpu.dimension_semantics<parallel>], iteration_bounds = array<i64: 1>, scalar_prefetch = 0 : i64, scratch_operands = 0 : i64, tpu.core_type = #tpu.core_type<tc>, window_params = [{transform_indices = @transform_0, window_bounds = array<i64: 2, 8, 32>}, {pipeline_mode = #tpu.pipeline_mode<synchronous>, transform_indices = @transform_1, window_bounds = array<i64: 1, 32>}, {transform_indices = @transform_2, window_bounds = array<i64: 1, 1>}, {transform_indices = @transform_3, window_bounds = array<i64: 2, 1, 32>}, {transform_indices = @transform_4, window_bounds = array<i64: 2, 8, 1>}]} {
    %c0 = arith.constant 0 : index
    %c0_0 = arith.constant 0 : index
    %c0_1 = arith.constant 0 : index
    %0 = vector.load %arg1[%c0, %c0_0, %c0_1] : memref<2x8x32xf32, #tpu.memory_space<vmem>>, vector<2x8x32xf32>
    %c0_2 = arith.constant 0 : index
    %c0_3 = arith.constant 0 : index
    %1 = vector.load %arg2[%c0_2, %c0_3] : memref<1x32xf32, #tpu.memory_space<vmem>>, vector<1x32xf32>
    %c0_4 = arith.constant 0 : index
    %c0_5 = arith.constant 0 : index
    %2 = memref.load %arg3[%c0_4, %c0_5] : memref<1x1xf32, #tpu.memory_space<smem>>
    %3 = math.tanh %0 : vector<2x8x32xf32>
    %4 = vector.shape_cast %1 : vector<1x32xf32> to vector<1x1x32xf32>
    %5 = vector.broadcast %4 : vector<1x1x32xf32> to vector<2x8x32xf32>
    %6 = arith.mulf %3, %5 : vector<2x8x32xf32>
    %cst = arith.constant dense<0.000000e+00> : vector<2x8xf32>
    %7 = vector.multi_reduction <add>, %6, %cst [2] : vector<2x8x32xf32> to vector<2x8xf32>
    %8 = vector.shape_cast %7 : vector<2x8xf32> to vector<2x8x1xf32>
    %9 = vector.broadcast %2 : f32 to vector<2x8x1xf32>
    %10 = arith.addf %8, %9 : vector<2x8x1xf32>
    %cst_6 = arith.constant dense<0xFF800000> : vector<2x1xf32>
    %11 = vector.multi_reduction <maximumf>, %10, %cst_6 [1] : vector<2x8x1xf32> to vector<2x1xf32>
    %12 = vector.shape_cast %11 : vector<2x1xf32> to vector<2x1x1xf32>
    %13 = vector.broadcast %12 : vector<2x1x1xf32> to vector<2x8x1xf32>
    %14 = arith.subf %10, %13 : vector<2x8x1xf32>
    %15 = math.exp %14 : vector<2x8x1xf32>
    %cst_7 = arith.constant dense<0.000000e+00> : vector<2x1xf32>
    %16 = vector.multi_reduction <add>, %15, %cst_7 [1] : vector<2x8x1xf32> to vector<2x1xf32>
    %17 = vector.shape_cast %16 : vector<2x1xf32> to vector<2x1x1xf32>
    %18 = vector.broadcast %17 : vector<2x1x1xf32> to vector<2x8x1xf32>
    %19 = arith.divf %15, %18 : vector<2x8x1xf32>
    %c0_8 = arith.constant 0 : index
    %c0_9 = arith.constant 0 : index
    %c0_10 = arith.constant 0 : index
    %20 = vector.load %arg5[%c0_8, %c0_9, %c0_10] : memref<2x8x1xf32, #tpu.memory_space<vmem>>, vector<2x8x1xf32>
    tpu.vector_store %arg5[%c0_8, %c0_9, %c0_10], %19 {strides = array<i32>} : memref<2x8x1xf32, #tpu.memory_space<vmem>>, vector<2x8x1xf32>,
    %21 = vector.broadcast %19 : vector<2x8x1xf32> to vector<2x8x32xf32>
    %22 = arith.mulf %0, %21 : vector<2x8x32xf32>
    %cst_11 = arith.constant dense<0.000000e+00> : vector<2x32xf32>
    %23 = vector.multi_reduction <add>, %22, %cst_11 [1] : vector<2x8x32xf32> to vector<2x32xf32>
    %24 = vector.shape_cast %23 : vector<2x32xf32> to vector<2x1x32xf32>
    %c0_12 = arith.constant 0 : index
    %c0_13 = arith.constant 0 : index
    %c0_14 = arith.constant 0 : index
    %25 = vector.load %arg4[%c0_12, %c0_13, %c0_14] : memref<2x1x32xf32, #tpu.memory_space<vmem>>, vector<2x1x32xf32>
    tpu.vector_store %arg4[%c0_12, %c0_13, %c0_14], %24 {strides = array<i32>} : memref<2x1x32xf32, #tpu.memory_space<vmem>>, vector<2x1x32xf32>,
    return
  }
  func.func @transform_0(%arg0: i32) -> (i32, i32, i32) {
    %c0_i32 = arith.constant 0 : i32
    %c0_i32_0 = arith.constant 0 : i32
    %c0_i32_1 = arith.constant 0 : i32
    return %arg0, %c0_i32, %c0_i32_0 : i32, i32, i32
  }
  func.func @transform_1(%arg0: i32) -> (i32, i32) {
    %c0_i32 = arith.constant 0 : i32
    %c0_i32_0 = arith.constant 0 : i32
    %c0_i32_1 = arith.constant 0 : i32
    return %c0_i32, %c0_i32_0 : i32, i32
  }
  func.func @transform_2(%arg0: i32) -> (i32, i32) {
    %c0_i32 = arith.constant 0 : i32
    %c0_i32_0 = arith.constant 0 : i32
    %c0_i32_1 = arith.constant 0 : i32
    return %c0_i32, %c0_i32_0 : i32, i32
  }
  func.func @transform_3(%arg0: i32) -> (i32, i32, i32) {
    %c0_i32 = arith.constant 0 : i32
    %c0_i32_0 = arith.constant 0 : i32
    %c0_i32_1 = arith.constant 0 : i32
    return %arg0, %c0_i32, %c0_i32_0 : i32, i32, i32
  }
  func.func @transform_4(%arg0: i32) -> (i32, i32, i32) {
    %c0_i32 = arith.constant 0 : i32
    %c0_i32_0 = arith.constant 0 : i32
    %c0_i32_1 = arith.constant 0 : i32
    return %arg0, %c0_i32, %c0_i32_0 : i32, i32, i32
  }
}

</mosaic_0001>

<llo_original>
// kernel: tpu_custom_call.1
$region0: #{tpu_custom_call.1}
  #allocation0 [shape = 'u32[]', space=smem, size = 0x4, offset = 0x4, fixed_abs, tag = 'smem constant byte address 0x4 - core index']
  #allocation1 [shape = 'u32[72,128]{1,0:T(1,128)}', space=vmem, size = 0x9000, scoped, tag = 'internal scratch']
  #allocation2 [shape = 'f32[1,1]{1,0:T(1,128)S(6)}', space=smem, size = 0x200, scoped, tag = 'scoped memory for tpu_custom_call.1']
  %s0 = inlined_call_operand.hbm [shape: f32[2,8,32], index: 0, kind: input, shape index: {}]
  %s1 = inlined_call_operand.vmem [shape: f32[1,32], index: 1, kind: input, shape index: {}]
  %s2 = inlined_call_operand.<no memory space> [shape: f32[1,1], index: 2, kind: input, shape index: {}]
  %s3 = inlined_call_operand.hbm [shape: f32[2,1,32], index: 3, kind: output, shape index: {0}]
  %s4 = inlined_call_operand.vmem [shape: f32[2,8,1], index: 4, kind: output, shape index: {1}]
  %5 = xla_tuple %s3, %s4
  %s6 = sld [smem:[#allocation0]]
  $region34: #{tpu_custom_call.1} parent=0
    _
  %s8 = ssub.s32 1, %s6
  %s9 = scalar_select 0, %s8, %s6
  %10 = sst [smem:[#allocation2]] %s2
  $region1: #{tpu_custom_call.1} parent=0
    #allocation3 [shape = 'u8[8192]{0}', space=vmem, size = 0x2000, scoped, tag = 'input window, operand 0, single buffered']
    #allocation4 [shape = 's32[1]{0}', space=sflag, size = 0x4, scoped, tag = 'scoped memory for tpu_custom_call.1']
    #allocation5 [shape = 's32[1]{0}', space=sflag, size = 0x4, scoped, tag = 'scoped memory for tpu_custom_call.1']
    #allocation6 [shape = 'u8[1024]{0}', space=vmem, size = 0x400, scoped, tag = 'output window, operand 0, single buffered']
    %11 = vsyncpa [#allocation4], 0
    %12 = vsyncpa [#allocation5], 0
    // Predicated region
    $region2: #{tpu_custom_call.1} parent=1 // pred_check
      _
    $region3: #{tpu_custom_call.1} parent=1 // pred_check_branch
      %14 = sbr.rel (0) target = $region5
    $region4: #{tpu_custom_call.1} parent=1 // pred_region
      %16 = vsyncadd [#allocation4], 0
      %s17 = sshll.u32 %s0, 4
      %s18 = int_to_ptr.hbm [resolvable:$true] %s17
      %s19 = sshll.u32 [#allocation3], 4
      %s20 = int_to_ptr.vmem [resolvable:$true] %s19
      %25 = dma.hbm_to_vmem [thread:$0]  %s18, 256, %s20, [#allocation4], 128, 128, 8
    $region5: #{tpu_custom_call.1} parent=1 // pred_fallthru
      _
    // Predicated region
    $region6: #{tpu_custom_call.1} parent=1 // pred_check
      _
    $region7: #{tpu_custom_call.1} parent=1 // pred_check_branch
      %27 = sbr.rel (0) target = $region9
    $region8: #{tpu_custom_call.1} parent=1 // pred_region
      _
    $region9: #{tpu_custom_call.1} parent=1 // pred_fallthru
      _
    // Predicated region
    $region10: #{tpu_custom_call.1} parent=1 // pred_check
      _
    $region11: #{tpu_custom_call.1} parent=1 // pred_check_branch
      %29 = sbr.rel (0) target = $region13
    $region12: #{tpu_custom_call.1} parent=1 // pred_region
      _
    $region13: #{tpu_custom_call.1} parent=1 // pred_fallthru
      _
    // Predicated region
    $region14: #{tpu_custom_call.1} parent=1 // pred_check
      _
    $region15: #{tpu_custom_call.1} parent=1 // pred_check_branch
      %31 = sbr.rel (0) target = $region17
    $region16: #{tpu_custom_call.1} parent=1 // pred_region
      %33 = dma.done [#allocation4], 256
    $region17: #{tpu_custom_call.1} parent=1 // pred_fallthru
      _
    %v34 = vld [vmem:[#allocation3] sm:$0xff]
    %v35 = vld [vmem:[#allocation3 + $0x8] sm:$0xff]
    %v36 = vld [vmem:[%s1] sm:$0x1]
    %s37 = sld [smem:[#allocation2]]
    %v38 = vtanh.pop %v34
    %v39 = vtanh.pop %v35
    %v41 = vperm.slane %v36, 0
    %v43 = vmul.f32 %v38, %v41
    %v44 = vmul.f32 %v39, %v41
    %vm45 = vcmask 261120
    %v46 = vsel %vm45, %v43, 0.0
    %47 = vadd.xlane.f32.xlu0 %v46
    %v48 = vpop.xlane.xlu0 %47
    %v49 = vsel %vm45, %v44, 0.0
    %50 = vadd.xlane.f32.xlu0 %v49
    %v51 = vpop.xlane.xlu0 %50
    %v52 = vstv %s37
    %v53 = vadd.f32 %v48, %v52
    %v54 = vadd.f32 %v51, %v52
    %v55 = vrot.slane %v53, 4
    %v56 = vmax.f32 %v53, %v55
    %v57 = vrot.slane %v56, 2
    %v58 = vmax.f32 %v56, %v57
    %v59 = vrot.slane %v58, 1
    %v60 = vmax.f32 %v58, %v59
    %v61 = vrot.slane %v54, 4
    %v62 = vmax.f32 %v54, %v61
    %v63 = vrot.slane %v62, 2
    %v64 = vmax.f32 %v62, %v63
    %v65 = vrot.slane %v64, 1
    %v66 = vmax.f32 %v64, %v65
    %v67 = vsub.f32 %v53, %v60
    %v68 = vsub.f32 %v54, %v66
    %v69 = vmul.f32 %v67, 1.442695
    %v70 = vpow.pop %v69
    %v71 = vmul.f32 %v68, 1.442695
    %v72 = vpow.pop %v71
    %v73 = vrot.slane %v70, 4
    %v74 = vadd.f32 %v70, %v73
    %v75 = vrot.slane %v74, 2
    %v76 = vadd.f32 %v74, %v75
    %v77 = vrot.slane %v76, 1
    %v78 = vadd.f32 %v76, %v77
    %v79 = vrot.slane %v72, 4
    %v80 = vadd.f32 %v72, %v79
    %v81 = vrot.slane %v80, 2
    %v82 = vadd.f32 %v80, %v81
    %v83 = vrot.slane %v82, 1
    %v84 = vadd.f32 %v82, %v83
    %v85 = vrcp.pop %v78
    %v86 = vmul.f32 %v78, %v85
    %v87 = vsub.f32 1.0, %v86
    %v88 = vmul.f32 %v85, %v87
    %v89 = vadd.f32 %v85, %v88
    %vm90 = vweird.f32 %v78
    %vm91 = vweird.f32 %v85
    %vm92 = vmor %vm90, %vm91
    %v93 = vsel %vm92, %v85, %v89
    %v94 = vand.u32 2147483647, %v78
    %vm95 = vcmp.eq.f32.partialorder %v94, 8.507059e+37
    %v96 = vand.u32 %v78, 2147483648
    %v97 = vor.u32 1.1754944e-38, %v96
    %v98 = vsel %vm95, %v97, %v93
    %v99 = vmul.f32 %v70, %v98
    %v100 = vrcp.pop %v84
    %v101 = vmul.f32 %v84, %v100
    %v102 = vsub.f32 1.0, %v101
    %v103 = vmul.f32 %v100, %v102
    %v104 = vadd.f32 %v100, %v103
    %vm105 = vweird.f32 %v84
    %vm106 = vweird.f32 %v100
    %vm107 = vmor %vm105, %vm106
    %v108 = vsel %vm107, %v100, %v104
    %v109 = vand.u32 2147483647, %v84
    %vm110 = vcmp.eq.f32.partialorder %v109, 8.507059e+37
    %v111 = vand.u32 %v84, 2147483648
    %v112 = vor.u32 1.1754944e-38, %v111
    %v113 = vsel %vm110, %v112, %v108
    %v114 = vmul.f32 %v72, %v113
    %vm115 = vcmask 7168
    %116 = vst.msk [vmem:[%s4] sm:$0xff] %vm115, %v99
    %117 = vst.msk [vmem:[%s4 + $0x8] sm:$0xff] %vm115, %v114
    %v118 = vmul.f32 %v34, %v99
    %v119 = vmul.f32 %v35, %v114
    %v120 = vsel %vm45, %v118, 0.0
    %v121 = vrot.slane %v120, 4
    %v122 = vadd.f32 %v120, %v121
    %v123 = vrot.slane %v122, 2
    %v124 = vadd.f32 %v122, %v123
    %v125 = vrot.slane %v124, 1
    %v126 = vadd.f32 %v124, %v125
    %v127 = vsel %vm45, %v119, 0.0
    %v128 = vrot.slane %v127, 4
    %v129 = vadd.f32 %v127, %v128
    %v130 = vrot.slane %v129, 2
    %v131 = vadd.f32 %v129, %v130
    %v132 = vrot.slane %v131, 1
    %v133 = vadd.f32 %v131, %v132
    %vm134 = vcmask 253952
    %135 = vst.msk [vmem:[#allocation6] sm:$0x1] %vm134, %v126
    %136 = vst.msk [vmem:[#allocation6 + $0x1] sm:$0x1] %vm134, %v133
    // Predicated region
    $region18: #{tpu_custom_call.1} parent=1 // pred_check
      _
    $region19: #{tpu_custom_call.1} parent=1 // pred_check_branch
      %138 = sbr.rel (0) target = $region21
    $region20: #{tpu_custom_call.1} parent=1 // pred_region
      %140 = vsyncadd [#allocation5], 0
      %s141 = sshll.u32 [#allocation6], 4
      %s142 = int_to_ptr.vmem [resolvable:$true] %s141
      %s143 = sshll.u32 %s3, 4
      %s144 = int_to_ptr.hbm [resolvable:$true] %s143
      %149 = dma.vmem_to_hbm [thread:$0]  %s142, 32, %s144, [#allocation5], 16, 16, 1
    $region21: #{tpu_custom_call.1} parent=1 // pred_fallthru
      _
    // Predicated region
    $region22: #{tpu_custom_call.1} parent=1 // pred_check
      _
    $region23: #{tpu_custom_call.1} parent=1 // pred_check_branch
      %151 = sbr.rel (0) target = $region25
    $region24: #{tpu_custom_call.1} parent=1 // pred_region
      _
    $region25: #{tpu_custom_call.1} parent=1 // pred_fallthru
      _
    // Predicated region
    $region26: #{tpu_custom_call.1} parent=1 // pred_check
      _
    $region27: #{tpu_custom_call.1} parent=1 // pred_check_branch
      %153 = sbr.rel (0) target = $region29
    $region28: #{tpu_custom_call.1} parent=1 // pred_region
      %155 = dma.done [#allocation5], 32
    $region29: #{tpu_custom_call.1} parent=1 // pred_fallthru
      _
    // Predicated region
    $region30: #{tpu_custom_call.1} parent=1 // pred_check
      _
    $region31: #{tpu_custom_call.1} parent=1 // pred_check_branch
      %157 = sbr.rel (0) target = $region33
    $region32: #{tpu_custom_call.1} parent=1 // pred_region
      _
    $region33: #{tpu_custom_call.1} parent=1 // pred_fallthru
      _
    %158 = vsyncpa [#allocation4], 1
    %159 = vsyncpa [#allocation5], 1

</llo_original>
